<compile_context>
chip_gen: v5e
topology: v5e:2x2
jax: 0.10.0
libtpu: 0.0.40
codegen_flags: <defaults>
</compile_context>

<pallas_src>
import functools

import jax
import jax.numpy as jnp
from jax import lax
from jax.experimental import pallas as pl
from jax.experimental.pallas import tpu as pltpu


def _round_up(n, m):
    return (n + m - 1) // m * m


def _pad_to(a, shape):
    pads = [(0, s - d) for d, s in zip(a.shape, shape)]
    if any(hi for _, hi in pads):
        return jnp.pad(a, pads)
    return a


# ----------------------------------------------------------------------------
# Fused FFN kernel.  grid = (B, n_t); one step = one (batch, time-tile) pair.
#   x_hbm  : (B, T_pad + 2H, D_pad) fp32, zero-padded, left in HBM (pl.ANY)
#   out_ref: (1, Tt, D_pad) fp32 block (auto-pipelined)
#   xbuf   : (2, E, D_pad) fp32 VMEM double buffer for the halo'd window
# ----------------------------------------------------------------------------
def ffn_kernel(x_hbm, g_ref, be_ref, w1_ref, b1_ref, w2_ref, b2_ref, out_ref,
               xbuf, sem, *, k1, k2, H, Tt, T, E, d_true, eps):
    b = pl.program_id(0)
    t = pl.program_id(1)
    n_t = pl.num_programs(1)
    slot = t % 2

    def fetch(tt, s):
        pltpu.make_async_copy(
            x_hbm.at[b, pl.ds(tt * Tt, E), :], xbuf.at[s], sem.at[s]).start()

    # Prime the pipeline at the start of each batch row.  t is the inner,
    # sequential ("arbitrary") grid axis, so each batch's pipeline is
    # self-contained and megacore sharding over b stays safe.
    @pl.when(t == 0)
    def _():
        fetch(0, slot)                      # slot == 0 at t == 0

    # Wait for this step's window (started here at t==0, else prefetched at t-1).
    pltpu.make_async_copy(
        x_hbm.at[b, pl.ds(0, E), :], xbuf.at[slot], sem.at[slot]).wait()

    # Prefetch the next window into the other slot; overlaps this step's compute.
    @pl.when(t + 1 < n_t)
    def _():
        fetch(t + 1, 1 - slot)

    xe = xbuf[slot]                                        # (E, D_pad) fp32

    # LayerNorm over the true feature width (padded feature lanes are zero and
    # gamma/beta are zero-padded, so padded lanes stay exactly zero).
    inv_d = 1.0 / d_true
    mu = jnp.sum(xe, axis=-1, keepdims=True) * inv_d
    diff = xe - mu
    if xe.shape[-1] != d_true:
        col = lax.broadcasted_iota(jnp.int32, xe.shape, 1)
        diff = jnp.where(col < d_true, diff, 0.0)
    var = jnp.sum(diff * diff, axis=-1, keepdims=True) * inv_d
    xn = diff * lax.rsqrt(var + eps) * g_ref[...] + be_ref[...]

    # Conv zero-padding happens AFTER LayerNorm in the reference module, so
    # window rows outside [0, T) (front halo, padded tail) must be zeroed here
    # (otherwise they would carry LayerNorm's beta into the convolution).
    row = lax.broadcasted_iota(jnp.int32, (E, 1), 0)
    gidx = t * Tt - H + row                                # global time index
    xn = jnp.where((gidx >= 0) & (gidx < T), xn, 0.0)

    xnb = xn.astype(jnp.bfloat16)                          # MXU operand

    # Conv1d #1 (kernel k1) as tap-shifted matmuls, fp32 accumulation.
    Th = Tt + k2 - 1                                       # hidden rows needed
    h = jnp.dot(xnb[0:Th], w1_ref[0], preferred_element_type=jnp.float32)
    for tap in range(1, k1):
        h = h + jnp.dot(xnb[tap:tap + Th], w1_ref[tap],
                        preferred_element_type=jnp.float32)
    h = jnp.maximum(h + b1_ref[...], 0.0)                  # bias + ReLU (fp32)
    hb = h.astype(jnp.bfloat16)

    # Conv1d #2 (kernel k2).
    o = jnp.dot(hb[0:Tt], w2_ref[0], preferred_element_type=jnp.float32)
    for tap in range(1, k2):
        o = o + jnp.dot(hb[tap:tap + Tt], w2_ref[tap],
                        preferred_element_type=jnp.float32)
    o = o + b2_ref[...]

    # TODO(synk): dropout is treated as identity (eval mode); training-mode
    # stochastic dropout is not implemented.
    out_ref[0] = (o + xe[H:H + Tt]).astype(out_ref.dtype)  # residual add


# ----------------------------------------------------------------------------
# Wrapper
# ----------------------------------------------------------------------------
def _estimate_vmem_bytes(Tt, E, D_pad, dh_pad, k1, k2):
    Th = Tt + k2 - 1
    b = 2 * E * D_pad * 4                                   # x window double buffer
    b += 2 * Tt * D_pad * 4 * 2                             # pipelined out blocks
    b += (k1 * D_pad * dh_pad + k2 * dh_pad * D_pad) * 2 * 2  # bf16 weights (2 bufs)
    b += E * D_pad * (4 + 2)                                # xn fp32 + bf16 copy
    b += Th * dh_pad * (4 + 2)                              # hidden fp32 + bf16 copy
    b += Tt * D_pad * 4                                     # conv2 accumulator
    return b


def positionwise_feed_forward(x, params, *, fft_kernel=(3, 1),
                              fft_padding=(1, 0), t_tile=None, eps=1e-5):
    B, T, D = x.shape
    k1, k2 = fft_kernel
    p1, p2 = fft_padding
    # Same-length convs (required by the residual add in the torch module).
    assert 2 * p1 == k1 - 1 and 2 * p2 == k2 - 1, "conv must preserve length"

    d_hid = params["w1"].shape[-1]
    D_pad = _round_up(D, 128)        # lane-dense stores + full MXU K occupancy
    dh_pad = _round_up(d_hid, 128)
    H = p1 + p2                      # halo rows per side

    # Time tile: fill the MXU M dimension, but keep the per-step working set
    # comfortably inside v7x's 64 MiB VMEM.
    if t_tile is not None:
        Tt = _round_up(t_tile, 8)
    else:
        Tt = min(256, _round_up(T, 8))
        while Tt > 64 and _estimate_vmem_bytes(Tt, Tt + 2 * H, D_pad, dh_pad,
                                               k1, k2) > 40 * 2**20:
            Tt = _round_up(max(64, Tt // 2), 8)
    T_pad = _round_up(T, Tt)
    n_t = T_pad // Tt
    E = Tt + 2 * H

    # Pad ONCE: halo rows + tile-multiple time + lane-multiple features, all
    # zero-filled.  No per-tile halo'd copies of the activation tensor; the
    # kernel reads overlapping windows straight out of HBM.
    if (H, T_pad, D_pad) == (0, T, D):
        x_pad = x
    else:
        x_pad = jnp.pad(x, ((0, 0), (H, T_pad - T + H), (0, D_pad - D)))

    ln_g = _pad_to(params["ln_g"].astype(jnp.float32), (1, D_pad))
    ln_b = _pad_to(params["ln_b"].astype(jnp.float32), (1, D_pad))
    w1 = _pad_to(params["w1"].astype(jnp.bfloat16), (k1, D_pad, dh_pad))
    b1 = _pad_to(params["b1"].astype(jnp.float32), (1, dh_pad))
    w2 = _pad_to(params["w2"].astype(jnp.bfloat16), (k2, dh_pad, D_pad))
    b2 = _pad_to(params["b2"].astype(jnp.float32), (1, D_pad))

    kern = functools.partial(ffn_kernel, k1=k1, k2=k2, H=H, Tt=Tt, T=T, E=E,
                             d_true=D, eps=eps)

    est = _estimate_vmem_bytes(Tt, E, D_pad, dh_pad, k1, k2)
    vmem_limit = int(min(60 * 2**20, max(24 * 2**20, 2 * est)))

    flops = 2 * B * T_pad * D_pad * dh_pad * (k1 + k2)
    bytes_accessed = (x_pad.size + B * T_pad * D_pad) * 4 + (w1.size + w2.size) * 2

    out = pl.pallas_call(
        kern,
        out_shape=jax.ShapeDtypeStruct((B, T_pad, D_pad), x.dtype),
        grid=(B, n_t),
        in_specs=[
            pl.BlockSpec(memory_space=pl.ANY),                       # x in HBM
            pl.BlockSpec((1, D_pad), lambda b, t: (0, 0)),           # ln gamma
            pl.BlockSpec((1, D_pad), lambda b, t: (0, 0)),           # ln beta
            pl.BlockSpec((k1, D_pad, dh_pad), lambda b, t: (0, 0, 0)),
            pl.BlockSpec((1, dh_pad), lambda b, t: (0, 0)),
            pl.BlockSpec((k2, dh_pad, D_pad), lambda b, t: (0, 0, 0)),
            pl.BlockSpec((1, D_pad), lambda b, t: (0, 0)),
        ],
        out_specs=pl.BlockSpec((1, Tt, D_pad), lambda b, t: (b, t, 0)),
        scratch_shapes=[
            pltpu.VMEM((2, E, D_pad), jnp.float32),                  # x window
            pltpu.SemaphoreType.DMA((2,)),
        ],
        compiler_params=pltpu.CompilerParams(
            dimension_semantics=("parallel", "arbitrary"),
            vmem_limit_bytes=vmem_limit),
        cost_estimate=pl.CostEstimate(flops=flops, transcendentals=B * T_pad,
                                      bytes_accessed=bytes_accessed),
    )(x_pad, ln_g, ln_b, w1, b1, w2, b2)

    if (T_pad, D_pad) == (T, D):
        return out
    return out[:, :T, :D]


# ----------------------------------------------------------------------------
# Pure-JAX reference (same bf16 weight/activation quantization as the kernel).
# ----------------------------------------------------------------------------
def positionwise_feed_forward_ref(x, params, *, fft_kernel=(3, 1),
                                  fft_padding=(1, 0), eps=1e-5):
    k1, k2 = fft_kernel
    p1, p2 = fft_padding
    B, T, D = x.shape
    gam, bet = params["ln_g"][0], params["ln_b"][0]

    mu = jnp.mean(x, axis=-1, keepdims=True)
    var = jnp.mean((x - mu) ** 2, axis=-1, keepdims=True)
    xn = (x - mu) * lax.rsqrt(var + eps) * gam + bet
    xnb = xn.astype(jnp.bfloat16)

    xp = jnp.pad(xnb, ((0, 0), (p1, p1), (0, 0)))
    h = jnp.zeros((B, T, params["b1"].shape[1]), jnp.float32)
    for tap in range(k1):
        h = h + jnp.einsum("btd,dh->bth", xp[:, tap:tap + T], params["w1"][tap],
                           preferred_element_type=jnp.float32)
    h = jnp.maximum(h + params["b1"][0], 0.0)
    hb = h.astype(jnp.bfloat16)

    hp = jnp.pad(hb, ((0, 0), (p2, p2), (0, 0)))
    o = jnp.zeros((B, T, D), jnp.float32)
    for tap in range(k2):
        o = o + jnp.einsum("bth,hd->btd", hp[:, tap:tap + T], params["w2"][tap],
                           preferred_element_type=jnp.float32)
    o = o + params["b2"][0]
    return o + x


# ----------------------------------------------------------------------------
# Deterministic parameter construction (shapes follow the PyTorch __init__).
# torch Conv1d weight (out_ch, in_ch, k) is stored here as (k, in_ch, out_ch)
# in bf16; LayerNorm / bias params stay fp32.
# ----------------------------------------------------------------------------
def init_params(key, d_in, d_hid, k1, k2):
    ks = jax.random.split(key, 4)
    f32, bf16 = jnp.float32, jnp.bfloat16
    return {
        "ln_g": jnp.ones((1, d_in), f32),
        "ln_b": jnp.zeros((1, d_in), f32),
        "w1": (0.05 * jax.random.normal(ks[0], (k1, d_in, d_hid), f32)).astype(bf16),
        "b1": 0.01 * jax.random.normal(ks[1], (1, d_hid), f32),
        "w2": (0.05 * jax.random.normal(ks[2], (k2, d_hid, d_in), f32)).astype(bf16),
        "b2": 0.01 * jax.random.normal(ks[3], (1, d_in), f32),
    }


if __name__ == "__main__":
    # Small shapes consistent with the module.  t_tile=8 exercises the
    # multi-tile + halo + prefetch path (T=16 -> 2 time tiles); D / d_hid get
    # padded to 128 inside the wrapper.
    B, T = 2, 16
    d_in, d_hid = 32, 64
    fft_kernel, fft_padding = (3, 1), (1, 0)

    key = jax.random.PRNGKey(0)
    k_x, k_p = jax.random.split(key)

    x = jax.random.normal(k_x, (B, T, d_in), jnp.float32)
    params = init_params(k_p, d_in, d_hid, fft_kernel[0], fft_kernel[1])

    out = positionwise_feed_forward(x, params, fft_kernel=fft_kernel,
                                    fft_padding=fft_padding, t_tile=8)
    out = jax.block_until_ready(out)

    ref = positionwise_feed_forward_ref(x, params, fft_kernel=fft_kernel,
                                        fft_padding=fft_padding)
    assert out.shape == (B, T, d_in)
    assert bool(jnp.allclose(out, ref, atol=3e-2, rtol=3e-2)), "mismatch vs reference"
    print("KERNEL_OK")
</pallas_src>

<mosaic_0001>
module attributes {stable_mosaic.version = 11 : i64} {
  func.func @ffn_kernel(%arg0: i32, %arg1: i32, %arg2: memref<2x18x128xf32, #tpu.memory_space<any>>, %arg3: memref<1x128xf32, #tpu.memory_space<vmem>>, %arg4: memref<1x128xf32, #tpu.memory_space<vmem>>, %arg5: memref<3x128x128xbf16, #tpu.memory_space<vmem>>, %arg6: memref<1x128xf32, #tpu.memory_space<vmem>>, %arg7: memref<1x128x128xbf16, #tpu.memory_space<vmem>>, %arg8: memref<1x128xf32, #tpu.memory_space<vmem>>, %arg9: memref<1x8x128xf32, #tpu.memory_space<vmem>>, %arg10: memref<2x10x128xf32, #tpu.memory_space<vmem>>, %arg11: memref<2x!tpu.dma_semaphore, #tpu.memory_space<semaphore_mem>>) attributes {dimension_semantics = [#tpu.dimension_semantics<parallel>, #tpu.dimension_semantics<arbitrary>], iteration_bounds = array<i64: 2, 2>, scalar_prefetch = 0 : i64, scratch_operands = 2 : i64, tpu.core_type = #tpu.core_type<tc>, window_params = [{}, {pipeline_mode = #tpu.pipeline_mode<synchronous>, transform_indices = @transform_1, window_bounds = array<i64: 1, 128>}, {pipeline_mode = #tpu.pipeline_mode<synchronous>, transform_indices = @transform_2, window_bounds = array<i64: 1, 128>}, {pipeline_mode = #tpu.pipeline_mode<synchronous>, transform_indices = @transform_3, window_bounds = array<i64: 3, 128, 128>}, {pipeline_mode = #tpu.pipeline_mode<synchronous>, transform_indices = @transform_4, window_bounds = array<i64: 1, 128>}, {pipeline_mode = #tpu.pipeline_mode<synchronous>, transform_indices = @transform_5, window_bounds = array<i64: 1, 128, 128>}, {pipeline_mode = #tpu.pipeline_mode<synchronous>, transform_indices = @transform_6, window_bounds = array<i64: 1, 128>}, {transform_indices = @transform_7, window_bounds = array<i64: 1, 8, 128>}]} {
    %c2_i32 = arith.constant 2 : i32
    %c0_i32 = arith.constant 0 : i32
    %0 = arith.cmpi eq, %c2_i32, %c0_i32 : i32
    %c1_i32 = arith.constant 1 : i32
    %1 = arith.select %0, %c1_i32, %c2_i32 : i32
    %2 = arith.remsi %arg1, %1 : i32
    %c0_i32_0 = arith.constant 0 : i32
    %3 = arith.cmpi ne, %2, %c0_i32_0 : i32
    %c0_i32_1 = arith.constant 0 : i32
    %4 = arith.cmpi slt, %2, %c0_i32_1 : i32
    %c0_i32_2 = arith.constant 0 : i32
    %5 = arith.cmpi slt, %1, %c0_i32_2 : i32
    %6 = arith.xori %4, %5 : i1
    %7 = arith.andi %6, %3 : i1
    %8 = arith.addi %2, %1 : i32
    %9 = arith.select %7, %8, %2 : i32
    %c0_i32_3 = arith.constant 0 : i32
    %10 = arith.cmpi eq, %arg1, %c0_i32_3 : i32
    %11 = arith.extui %10 : i1 to i32
    %c0_i32_4 = arith.constant 0 : i32
    %12 = arith.cmpi ne, %11, %c0_i32_4 : i32
    scf.if %12 {
      %c0_i32_47 = arith.constant 0 : i32
      %c0_i32_48 = arith.constant 0 : i32
      %99 = tpu.memref_slice %arg2[%arg0, %c0_i32_47, %c0_i32_48] : memref<2x18x128xf32, #tpu.memory_space<any>> -> memref<1x10x128xf32, #tpu.memory_space<any>>
      %100 = tpu.memref_squeeze %99 : memref<1x10x128xf32, #tpu.memory_space<any>> -> memref<10x128xf32, #tpu.memory_space<any>>
      %c0_i32_49 = arith.constant 0 : i32
      %c0_i32_50 = arith.constant 0 : i32
      %101 = tpu.memref_slice %arg10[%9, %c0_i32_49, %c0_i32_50] : memref<2x10x128xf32, #tpu.memory_space<vmem>> -> memref<1x10x128xf32, #tpu.memory_space<vmem>>
      %102 = tpu.memref_squeeze %101 : memref<1x10x128xf32, #tpu.memory_space<vmem>> -> memref<10x128xf32, #tpu.memory_space<vmem>>
      %103 = tpu.memref_slice %arg11[%9] : memref<2x!tpu.dma_semaphore, #tpu.memory_space<semaphore_mem>> -> memref<1x!tpu.dma_semaphore, #tpu.memory_space<semaphore_mem>>
      %104 = tpu.memref_squeeze %103 : memref<1x!tpu.dma_semaphore, #tpu.memory_space<semaphore_mem>> -> memref<!tpu.dma_semaphore, #tpu.memory_space<semaphore_mem>>
      tpu.enqueue_dma source(%100 : memref<10x128xf32, #tpu.memory_space<any>>) target(%102 : memref<10x128xf32, #tpu.memory_space<vmem>>) target_semaphore(%104 : memref<!tpu.dma_semaphore, #tpu.memory_space<semaphore_mem>>)
    } else {
    }
    %c0_i32_5 = arith.constant 0 : i32
    %c0_i32_6 = arith.constant 0 : i32
    %13 = tpu.memref_slice %arg2[%arg0, %c0_i32_5, %c0_i32_6] : memref<2x18x128xf32, #tpu.memory_space<any>> -> memref<1x10x128xf32, #tpu.memory_space<any>>
    %14 = tpu.memref_squeeze %13 : memref<1x10x128xf32, #tpu.memory_space<any>> -> memref<10x128xf32, #tpu.memory_space<any>>
    %c0_i32_7 = arith.constant 0 : i32
    %c0_i32_8 = arith.constant 0 : i32
    %15 = tpu.memref_slice %arg10[%9, %c0_i32_7, %c0_i32_8] : memref<2x10x128xf32, #tpu.memory_space<vmem>> -> memref<1x10x128xf32, #tpu.memory_space<vmem>>
    %16 = tpu.memref_squeeze %15 : memref<1x10x128xf32, #tpu.memory_space<vmem>> -> memref<10x128xf32, #tpu.memory_space<vmem>>
    %17 = tpu.memref_slice %arg11[%9] : memref<2x!tpu.dma_semaphore, #tpu.memory_space<semaphore_mem>> -> memref<1x!tpu.dma_semaphore, #tpu.memory_space<semaphore_mem>>
    %18 = tpu.memref_squeeze %17 : memref<1x!tpu.dma_semaphore, #tpu.memory_space<semaphore_mem>> -> memref<!tpu.dma_semaphore, #tpu.memory_space<semaphore_mem>>
    tpu.wait_dma2 semaphore(%18 : memref<!tpu.dma_semaphore, #tpu.memory_space<semaphore_mem>>) src(%14 : memref<10x128xf32, #tpu.memory_space<any>>) dst(%16 : memref<10x128xf32, #tpu.memory_space<vmem>>)
    %c1_i32_9 = arith.constant 1 : i32
    %19 = arith.addi %arg1, %c1_i32_9 : i32
    %c2_i32_10 = arith.constant 2 : i32
    %20 = arith.cmpi slt, %19, %c2_i32_10 : i32
    %21 = arith.extui %20 : i1 to i32
    %c0_i32_11 = arith.constant 0 : i32
    %22 = arith.cmpi ne, %21, %c0_i32_11 : i32
    scf.if %22 {
      %c1_i32_47 = arith.constant 1 : i32
      %99 = arith.addi %arg1, %c1_i32_47 : i32
      %c1_i32_48 = arith.constant 1 : i32
      %100 = arith.subi %c1_i32_48, %9 : i32
      %c8_i32_49 = arith.constant 8 : i32
      %101 = arith.muli %99, %c8_i32_49 : i32
      %c0_i32_50 = arith.constant 0 : i32
      %102 = tpu.memref_slice %arg2[%arg0, %101, %c0_i32_50] : memref<2x18x128xf32, #tpu.memory_space<any>> -> memref<1x10x128xf32, #tpu.memory_space<any>>
      %103 = tpu.memref_squeeze %102 : memref<1x10x128xf32, #tpu.memory_space<any>> -> memref<10x128xf32, #tpu.memory_space<any>>
      %c0_i32_51 = arith.constant 0 : i32
      %c0_i32_52 = arith.constant 0 : i32
      %104 = tpu.memref_slice %arg10[%100, %c0_i32_51, %c0_i32_52] : memref<2x10x128xf32, #tpu.memory_space<vmem>> -> memref<1x10x128xf32, #tpu.memory_space<vmem>>
      %105 = tpu.memref_squeeze %104 : memref<1x10x128xf32, #tpu.memory_space<vmem>> -> memref<10x128xf32, #tpu.memory_space<vmem>>
      %106 = tpu.memref_slice %arg11[%100] : memref<2x!tpu.dma_semaphore, #tpu.memory_space<semaphore_mem>> -> memref<1x!tpu.dma_semaphore, #tpu.memory_space<semaphore_mem>>
      %107 = tpu.memref_squeeze %106 : memref<1x!tpu.dma_semaphore, #tpu.memory_space<semaphore_mem>> -> memref<!tpu.dma_semaphore, #tpu.memory_space<semaphore_mem>>
      tpu.enqueue_dma source(%103 : memref<10x128xf32, #tpu.memory_space<any>>) target(%105 : memref<10x128xf32, #tpu.memory_space<vmem>>) target_semaphore(%107 : memref<!tpu.dma_semaphore, #tpu.memory_space<semaphore_mem>>)
    } else {
    }
    %23 = arith.index_cast %9 : i32 to index
    %c0 = arith.constant 0 : index
    %c0_12 = arith.constant 0 : index
    %24 = vector.load %arg10[%23, %c0, %c0_12] : memref<2x10x128xf32, #tpu.memory_space<vmem>>, vector<1x10x128xf32>
    %25 = vector.shape_cast %24 : vector<1x10x128xf32> to vector<10x128xf32>
    %cst = arith.constant dense<0.000000e+00> : vector<10xf32>
    %26 = vector.multi_reduction <add>, %25, %cst [1] : vector<10x128xf32> to vector<10xf32>
    %27 = vector.shape_cast %26 : vector<10xf32> to vector<10x1xf32>
    %cst_13 = arith.constant 3.125000e-02 : f32
    %28 = vector.broadcast %cst_13 : f32 to vector<10x1xf32>
    %29 = arith.mulf %27, %28 : vector<10x1xf32>
    %30 = vector.broadcast %29 : vector<10x1xf32> to vector<10x128xf32>
    %31 = arith.subf %25, %30 : vector<10x128xf32>
    %32 = tpu.iota {dimensions = array<i32: 1>} : vector<10x128xi32>
    %c32_i32 = arith.constant 32 : i32
    %33 = vector.broadcast %c32_i32 : i32 to vector<10x128xi32>
    %34 = arith.cmpi slt, %32, %33 : vector<10x128xi32>
    %cst_14 = arith.constant 0.000000e+00 : f32
    %35 = vector.broadcast %cst_14 : f32 to vector<10x128xf32>
    %36 = arith.select %34, %31, %35 : vector<10x128xi1>, vector<10x128xf32>
    %37 = arith.mulf %36, %36 : vector<10x128xf32>
    %cst_15 = arith.constant dense<0.000000e+00> : vector<10xf32>
    %38 = vector.multi_reduction <add>, %37, %cst_15 [1] : vector<10x128xf32> to vector<10xf32>
    %39 = vector.shape_cast %38 : vector<10xf32> to vector<10x1xf32>
    %cst_16 = arith.constant 3.125000e-02 : f32
    %40 = vector.broadcast %cst_16 : f32 to vector<10x1xf32>
    %41 = arith.mulf %39, %40 : vector<10x1xf32>
    %cst_17 = arith.constant 9.99999974E-6 : f32
    %42 = vector.broadcast %cst_17 : f32 to vector<10x1xf32>
    %43 = arith.addf %41, %42 : vector<10x1xf32>
    %44 = math.rsqrt %43 : vector<10x1xf32>
    %45 = vector.broadcast %44 : vector<10x1xf32> to vector<10x128xf32>
    %46 = arith.mulf %36, %45 : vector<10x128xf32>
    %c0_18 = arith.constant 0 : index
    %c0_19 = arith.constant 0 : index
    %47 = vector.load %arg3[%c0_18, %c0_19] : memref<1x128xf32, #tpu.memory_space<vmem>>, vector<1x128xf32>
    %48 = vector.broadcast %47 : vector<1x128xf32> to vector<10x128xf32>
    %49 = arith.mulf %46, %48 : vector<10x128xf32>
    %c0_20 = arith.constant 0 : index
    %c0_21 = arith.constant 0 : index
    %50 = vector.load %arg4[%c0_20, %c0_21] : memref<1x128xf32, #tpu.memory_space<vmem>>, vector<1x128xf32>
    %51 = vector.broadcast %50 : vector<1x128xf32> to vector<10x128xf32>
    %52 = arith.addf %49, %51 : vector<10x128xf32>
    %53 = tpu.iota {dimensions = array<i32: 0>} : vector<10x1xi32>
    %c8_i32 = arith.constant 8 : i32
    %54 = arith.muli %arg1, %c8_i32 : i32
    %c1_i32_22 = arith.constant 1 : i32
    %55 = arith.subi %54, %c1_i32_22 : i32
    %56 = vector.broadcast %55 : i32 to vector<10x1xi32>
    %57 = arith.addi %56, %53 : vector<10x1xi32>
    %c0_i32_23 = arith.constant 0 : i32
    %58 = vector.broadcast %c0_i32_23 : i32 to vector<10x1xi32>
    %59 = arith.cmpi sge, %57, %58 : vector<10x1xi32>
    %c16_i32 = arith.constant 16 : i32
    %60 = vector.broadcast %c16_i32 : i32 to vector<10x1xi32>
    %61 = arith.cmpi slt, %57, %60 : vector<10x1xi32>
    %62 = arith.andi %59, %61 : vector<10x1xi1>
    %cst_24 = arith.constant 0.000000e+00 : f32
    %63 = vector.shape_cast %62 : vector<10x1xi1> to vector<10x1xi1>
    %64 = vector.broadcast %63 : vector<10x1xi1> to vector<10x128xi1>
    %65 = vector.broadcast %cst_24 : f32 to vector<10x128xf32>
    %66 = arith.select %64, %52, %65 : vector<10x128xi1>, vector<10x128xf32>
    %67 = arith.truncf %66 : vector<10x128xf32> to vector<10x128xbf16>
    %68 = vector.extract_strided_slice %67 {offsets = [0, 0], sizes = [8, 128], strides = [1, 1]} : vector<10x128xbf16> to vector<8x128xbf16>
    %c0_25 = arith.constant 0 : index
    %c0_26 = arith.constant 0 : index
    %c0_27 = arith.constant 0 : index
    %69 = vector.load %arg5[%c0_25, %c0_26, %c0_27] : memref<3x128x128xbf16, #tpu.memory_space<vmem>>, vector<1x128x128xbf16>
    %70 = vector.shape_cast %69 : vector<1x128x128xbf16> to vector<128x128xbf16>
    %cst_28 = arith.constant dense<0.000000e+00> : vector<8x128xf32>
    %71 = tpu.matmul %68, %70, %cst_28 {dimension_numbers = #tpu.dot_dimension_numbers<[1], [0], [0], [1], [0, 0, 1, 1], [], []>} : vector<8x128xbf16>, vector<128x128xbf16>, vector<8x128xf32> -> vector<8x128xf32>
    %72 = vector.extract_strided_slice %67 {offsets = [1, 0], sizes = [8, 128], strides = [1, 1]} : vector<10x128xbf16> to vector<8x128xbf16>
    %c1 = arith.constant 1 : index
    %c0_29 = arith.constant 0 : index
    %c0_30 = arith.constant 0 : index
    %73 = vector.load %arg5[%c1, %c0_29, %c0_30] : memref<3x128x128xbf16, #tpu.memory_space<vmem>>, vector<1x128x128xbf16>
    %74 = vector.shape_cast %73 : vector<1x128x128xbf16> to vector<128x128xbf16>
    %cst_31 = arith.constant dense<0.000000e+00> : vector<8x128xf32>
    %75 = tpu.matmul %72, %74, %cst_31 {dimension_numbers = #tpu.dot_dimension_numbers<[1], [0], [0], [1], [0, 0, 1, 1], [], []>} : vector<8x128xbf16>, vector<128x128xbf16>, vector<8x128xf32> -> vector<8x128xf32>
    %76 = arith.addf %71, %75 : vector<8x128xf32>
    %77 = vector.extract_strided_slice %67 {offsets = [2, 0], sizes = [8, 128], strides = [1, 1]} : vector<10x128xbf16> to vector<8x128xbf16>
    %c2 = arith.constant 2 : index
    %c0_32 = arith.constant 0 : index
    %c0_33 = arith.constant 0 : index
    %78 = vector.load %arg5[%c2, %c0_32, %c0_33] : memref<3x128x128xbf16, #tpu.memory_space<vmem>>, vector<1x128x128xbf16>
    %79 = vector.shape_cast %78 : vector<1x128x128xbf16> to vector<128x128xbf16>
    %cst_34 = arith.constant dense<0.000000e+00> : vector<8x128xf32>
    %80 = tpu.matmul %77, %79, %cst_34 {dimension_numbers = #tpu.dot_dimension_numbers<[1], [0], [0], [1], [0, 0, 1, 1], [], []>} : vector<8x128xbf16>, vector<128x128xbf16>, vector<8x128xf32> -> vector<8x128xf32>
    %81 = arith.addf %76, %80 : vector<8x128xf32>
    %c0_35 = arith.constant 0 : index
    %c0_36 = arith.constant 0 : index
    %82 = vector.load %arg6[%c0_35, %c0_36] : memref<1x128xf32, #tpu.memory_space<vmem>>, vector<1x128xf32>
    %83 = vector.broadcast %82 : vector<1x128xf32> to vector<8x128xf32>
    %84 = arith.addf %81, %83 : vector<8x128xf32>
    %cst_37 = arith.constant 0.000000e+00 : f32
    %85 = vector.broadcast %cst_37 : f32 to vector<8x128xf32>
    %86 = arith.maximumf %84, %85 : vector<8x128xf32>
    %87 = arith.truncf %86 : vector<8x128xf32> to vector<8x128xbf16>
    %c0_38 = arith.constant 0 : index
    %c0_39 = arith.constant 0 : index
    %c0_40 = arith.constant 0 : index
    %88 = vector.load %arg7[%c0_38, %c0_39, %c0_40] : memref<1x128x128xbf16, #tpu.memory_space<vmem>>, vector<1x128x128xbf16>
    %89 = vector.shape_cast %88 : vector<1x128x128xbf16> to vector<128x128xbf16>
    %cst_41 = arith.constant dense<0.000000e+00> : vector<8x128xf32>
    %90 = tpu.matmul %87, %89, %cst_41 {dimension_numbers = #tpu.dot_dimension_numbers<[1], [0], [0], [1], [0, 0, 1, 1], [], []>} : vector<8x128xbf16>, vector<128x128xbf16>, vector<8x128xf32> -> vector<8x128xf32>
    %c0_42 = arith.constant 0 : index
    %c0_43 = arith.constant 0 : index
    %91 = vector.load %arg8[%c0_42, %c0_43] : memref<1x128xf32, #tpu.memory_space<vmem>>, vector<1x128xf32>
    %92 = vector.broadcast %91 : vector<1x128xf32> to vector<8x128xf32>
    %93 = arith.addf %90, %92 : vector<8x128xf32>
    %94 = vector.extract_strided_slice %25 {offsets = [1, 0], sizes = [8, 128], strides = [1, 1]} : vector<10x128xf32> to vector<8x128xf32>
    %95 = arith.addf %93, %94 : vector<8x128xf32>
    %c0_44 = arith.constant 0 : index
    %c0_45 = arith.constant 0 : index
    %c0_46 = arith.constant 0 : index
    %96 = vector.load %arg9[%c0_44, %c0_45, %c0_46] : memref<1x8x128xf32, #tpu.memory_space<vmem>>, vector<1x8x128xf32>
    %97 = vector.shape_cast %96 : vector<1x8x128xf32> to vector<8x128xf32>
    %98 = vector.shape_cast %95 : vector<8x128xf32> to vector<1x8x128xf32>
    tpu.vector_store %arg9[%c0_44, %c0_45, %c0_46], %98 {strides = array<i32>} : memref<1x8x128xf32, #tpu.memory_space<vmem>>, vector<1x8x128xf32>,
    return
  }
  func.func @transform_1(%arg0: i32, %arg1: i32) -> (i32, i32) {
    %c0_i32 = arith.constant 0 : i32
    %c0_i32_0 = arith.constant 0 : i32
    %c0_i32_1 = arith.constant 0 : i32
    return %c0_i32, %c0_i32_0 : i32, i32
  }
  func.func @transform_2(%arg0: i32, %arg1: i32) -> (i32, i32) {
    %c0_i32 = arith.constant 0 : i32
    %c0_i32_0 = arith.constant 0 : i32
    %c0_i32_1 = arith.constant 0 : i32
    return %c0_i32, %c0_i32_0 : i32, i32
  }
  func.func @transform_3(%arg0: i32, %arg1: i32) -> (i32, i32, i32) {
    %c0_i32 = arith.constant 0 : i32
    %c0_i32_0 = arith.constant 0 : i32
    %c0_i32_1 = arith.constant 0 : i32
    %c0_i32_2 = arith.constant 0 : i32
    return %c0_i32, %c0_i32_0, %c0_i32_1 : i32, i32, i32
  }
  func.func @transform_4(%arg0: i32, %arg1: i32) -> (i32, i32) {
    %c0_i32 = arith.constant 0 : i32
    %c0_i32_0 = arith.constant 0 : i32
    %c0_i32_1 = arith.constant 0 : i32
    return %c0_i32, %c0_i32_0 : i32, i32
  }
  func.func @transform_5(%arg0: i32, %arg1: i32) -> (i32, i32, i32) {
    %c0_i32 = arith.constant 0 : i32
    %c0_i32_0 = arith.constant 0 : i32
    %c0_i32_1 = arith.constant 0 : i32
    %c0_i32_2 = arith.constant 0 : i32
    return %c0_i32, %c0_i32_0, %c0_i32_1 : i32, i32, i32
  }
  func.func @transform_6(%arg0: i32, %arg1: i32) -> (i32, i32) {
    %c0_i32 = arith.constant 0 : i32
    %c0_i32_0 = arith.constant 0 : i32
    %c0_i32_1 = arith.constant 0 : i32
    return %c0_i32, %c0_i32_0 : i32, i32
  }
  func.func @transform_7(%arg0: i32, %arg1: i32) -> (i32, i32, i32) {
    %c0_i32 = arith.constant 0 : i32
    %c0_i32_0 = arith.constant 0 : i32
    return %arg0, %arg1, %c0_i32 : i32, i32, i32
  }
}

</mosaic_0001>

<llo_original>
// kernel: tpu_custom_call.1
$region0: #{tpu_custom_call.1}
  #allocation0 [shape = 'u32[]', space=smem, size = 0x4, offset = 0x4, fixed_abs, tag = 'smem constant byte address 0x4 - core index']
  #allocation1 [shape = 'u32[72,128]{1,0:T(1,128)}', space=vmem, size = 0x9000, scoped, tag = 'internal scratch']
  #allocation2 [shape = 'f32[2,10,128]{2,1,0:T(8,128)}', space=vmem, size = 0x4000, scoped, tag = 'scratch operand']
  #allocation3 [shape = 's32[2]{0}', space=sflag, size = 0x8, scoped, tag = 'scratch operand']
  #allocation8 [shape = 's32[]', space=sflag, size = 0x4, offset = 0, fixed_abs, tag = 'sflag constant byte address 0x0 - dummy sync flag']
  #allocation9 [shape = 's32[]', space=sflag, size = 0x4, offset = 0, fixed_abs, tag = 'sflag constant byte address 0x0 - dummy sync flag']
  %s0 = inlined_call_operand.vmem [shape: f32[2,18,128], index: 0, kind: input, shape index: {}]
  %s1 = inlined_call_operand.vmem [shape: f32[1,128], index: 1, kind: input, shape index: {}]
  %s2 = inlined_call_operand.vmem [shape: f32[1,128], index: 2, kind: input, shape index: {}]
  %s3 = inlined_call_operand.hbm [shape: bf16[3,128,128], index: 3, kind: input, shape index: {}]
  %s4 = inlined_call_operand.vmem [shape: f32[1,128], index: 4, kind: input, shape index: {}]
  %s5 = inlined_call_operand.vmem [shape: bf16[1,128,128], index: 5, kind: input, shape index: {}]
  %s6 = inlined_call_operand.vmem [shape: f32[1,128], index: 6, kind: input, shape index: {}]
  %s7 = inlined_call_operand.hbm [shape: f32[2,16,128], index: 7, kind: output, shape index: {}]
  %s8 = sld [smem:[#allocation0]]
  $region113: #{tpu_custom_call.1} parent=0
    _
  %s10 = ssub.s32 1, %s8
  %s11 = scalar_select 0, %s10, %s8
  $region1: #{tpu_custom_call.1} parent=0
    #allocation4 [shape = 'u8[98304]{0}', space=vmem, size = 0x18000, scoped, tag = 'input window, operand 3, single buffered']
    #allocation5 [shape = 's32[2]{0}', space=sflag, size = 0x8, scoped, tag = 'scoped memory for tpu_custom_call.1']
    #allocation6 [shape = 's32[2]{0}', space=sflag, size = 0x8, scoped, tag = 'scoped memory for tpu_custom_call.1']
    #allocation7 [shape = 'u8[8192]{0}', space=vmem, size = 0x2000, scoped, tag = 'output window, operand 0']
    %12 = vsyncpa [#allocation5], 0
    %13 = vsyncpa [#allocation6], 0
    %s14 = scalar_lea.sflag [#allocation6], 1
    %15 = vsyncpa %s14, 0
    loop: start=0, step=1, limit=6
    $region2: #{tpu_custom_call.1} parent=1 // loop_pre_header
      _
    $region3: #{tpu_custom_call.1} parent=1 // loop_header
      %s17 = sphi 0, %s21
      %p18 = scmp.ge.s32.totalorder %s17, 6
      %s24 = sphi 0, %s36
      %s25 = sphi 0, %s32
      %s26 = sphi 0, %s24
      %s27 = sphi 0, %s25
      %s28 = sphi 0, %s26
      %s29 = sphi 0, %s27
      %s37 = sphi 0, %s37
      %s39 = sphi 0, %s37
      %s40 = sphi 0, %s39
      %s54 = sphi 0, %s40
      %s58 = sphi 0, %s58
      %s60 = sphi 0, %s58
      %s61 = sphi 0, %s60
      %s75 = sphi 0, %s61
      %s79 = sphi 0, %s79
      %s81 = sphi 0, %s79
      %s82 = sphi 0, %s81
      %s96 = sphi 0, %s82
      %s100 = sphi 0, %s100
      %s102 = sphi 0, %s100
      %s103 = sphi 0, %s102
      %s117 = sphi 0, %s103
      %s121 = sphi 0, %s121
      %s123 = sphi 0, %s121
      %s124 = sphi 0, %s123
      %s138 = sphi 0, %s124
      %s142 = sphi 0, %s142
      %s144 = sphi 0, %s142
      %s145 = sphi 0, %s144
      %s159 = sphi 0, %s145
      %s167 = sphi 0, %s169
      %s170 = sphi 0, %s167
      %s171 = sphi 0, %s170
      %s187 = sphi 0, %s171
    $region4: #{tpu_custom_call.1} parent=1 // loop_header_branch
      %20 = sbr.rel (%p18) target = $region8
    $region5: #{tpu_custom_call.1} parent=1 // loop_body
      %s22 = ssub.s32 %s17, 1
      %s23 = ssub.s32 %s17, 2
      %s30 = sadd.s32 1, %s25
      %p31 = scmp.ge.s32.totalorder %s30, 2
      %s32 = scalar_select %p31, 0, %s30
      %s33 = sadd.s32 1, %s24
      %s34 = scalar_select %p31, %s33, %s24
      %p35 = scmp.ge.s32.totalorder %s34, 2
      %s36 = scalar_select %p35, 0, %s34
      %s38 = sadd.s32 %s37, 1
      %p41 = scmp.eq.s32.totalorder %s17, 3
      %p42 = scmp.ne.s32.totalorder %s37, %s39
      %p43 = scmp.eq.s32.totalorder %s17, 0
      %p44 = por %p42, %p43
      %p45 = scmp.ne.s32.totalorder %s37, %s39
      %p46 = scmp.eq.s32.totalorder %s22, 3
      %p47 = por %p45, %p46
      %p48 = scmp.ne.s32.totalorder %s39, %s40
      %p49 = scmp.eq.s32.totalorder %s22, 0
      %p50 = por %p48, %p49
      %p51 = scmp.ne.s32.totalorder %s39, %s40
      %p52 = scmp.eq.s32.totalorder %s23, 3
      %p53 = por %p51, %p52
      %p55 = scmp.ne.s32.totalorder %s40, %s54
      %p56 = scmp.eq.s32.totalorder %s23, 0
      %p57 = por %p55, %p56
      %s59 = sadd.s32 %s58, 1
      %p62 = scmp.eq.s32.totalorder %s17, 3
      %p63 = scmp.ne.s32.totalorder %s58, %s60
      %p64 = scmp.eq.s32.totalorder %s17, 0
      %p65 = por %p63, %p64
      %p66 = scmp.ne.s32.totalorder %s58, %s60
      %p67 = scmp.eq.s32.totalorder %s22, 3
      %p68 = por %p66, %p67
      %p69 = scmp.ne.s32.totalorder %s60, %s61
      %p70 = scmp.eq.s32.totalorder %s22, 0
      %p71 = por %p69, %p70
      %p72 = scmp.ne.s32.totalorder %s60, %s61
      %p73 = scmp.eq.s32.totalorder %s23, 3
      %p74 = por %p72, %p73
      %p76 = scmp.ne.s32.totalorder %s61, %s75
      %p77 = scmp.eq.s32.totalorder %s23, 0
      %p78 = por %p76, %p77
      %s80 = sadd.s32 %s79, 1
      %p83 = scmp.eq.s32.totalorder %s17, 3
      %p84 = scmp.ne.s32.totalorder %s79, %s81
      %p85 = scmp.eq.s32.totalorder %s17, 0
      %p86 = por %p84, %p85
      %p87 = scmp.ne.s32.totalorder %s79, %s81
      %p88 = scmp.eq.s32.totalorder %s22, 3
      %p89 = por %p87, %p88
      %p90 = scmp.ne.s32.totalorder %s81, %s82
      %p91 = scmp.eq.s32.totalorder %s22, 0
      %p92 = por %p90, %p91
      %p93 = scmp.ne.s32.totalorder %s81, %s82
      %p94 = scmp.eq.s32.totalorder %s23, 3
      %p95 = por %p93, %p94
      %p97 = scmp.ne.s32.totalorder %s82, %s96
      %p98 = scmp.eq.s32.totalorder %s23, 0
      %p99 = por %p97, %p98
      %s101 = sadd.s32 %s100, 1
      %p104 = scmp.eq.s32.totalorder %s17, 3
      %p105 = scmp.ne.s32.totalorder %s100, %s102
      %p106 = scmp.eq.s32.totalorder %s17, 0
      %p107 = por %p105, %p106
      %p108 = scmp.ne.s32.totalorder %s100, %s102
      %p109 = scmp.eq.s32.totalorder %s22, 3
      %p110 = por %p108, %p109
      %p111 = scmp.ne.s32.totalorder %s102, %s103
      %p112 = scmp.eq.s32.totalorder %s22, 0
      %p113 = por %p111, %p112
      %p114 = scmp.ne.s32.totalorder %s102, %s103
      %p115 = scmp.eq.s32.totalorder %s23, 3
      %p116 = por %p114, %p115
      %p118 = scmp.ne.s32.totalorder %s103, %s117
      %p119 = scmp.eq.s32.totalorder %s23, 0
      %p120 = por %p118, %p119
      %s122 = sadd.s32 %s121, 1
      %p125 = scmp.eq.s32.totalorder %s17, 3
      %p126 = scmp.ne.s32.totalorder %s121, %s123
      %p127 = scmp.eq.s32.totalorder %s17, 0
      %p128 = por %p126, %p127
      %p129 = scmp.ne.s32.totalorder %s121, %s123
      %p130 = scmp.eq.s32.totalorder %s22, 3
      %p131 = por %p129, %p130
      %p132 = scmp.ne.s32.totalorder %s123, %s124
      %p133 = scmp.eq.s32.totalorder %s22, 0
      %p134 = por %p132, %p133
      %p135 = scmp.ne.s32.totalorder %s123, %s124
      %p136 = scmp.eq.s32.totalorder %s23, 3
      %p137 = por %p135, %p136
      %p139 = scmp.ne.s32.totalorder %s124, %s138
      %p140 = scmp.eq.s32.totalorder %s23, 0
      %p141 = por %p139, %p140
      %s143 = sadd.s32 %s142, 1
      %p146 = scmp.eq.s32.totalorder %s17, 3
      %p147 = scmp.ne.s32.totalorder %s142, %s144
      %p148 = scmp.eq.s32.totalorder %s17, 0
      %p149 = por %p147, %p148
      %p150 = scmp.ne.s32.totalorder %s142, %s144
      %p151 = scmp.eq.s32.totalorder %s22, 3
      %p152 = por %p150, %p151
      %p153 = scmp.ne.s32.totalorder %s144, %s145
      %p154 = scmp.eq.s32.totalorder %s22, 0
      %p155 = por %p153, %p154
      %p156 = scmp.ne.s32.totalorder %s144, %s145
      %p157 = scmp.eq.s32.totalorder %s23, 3
      %p158 = por %p156, %p157
      %p160 = scmp.ne.s32.totalorder %s145, %s159
      %p161 = scmp.eq.s32.totalorder %s23, 0
      %p162 = por %p160, %p161
      %s163 = ssub.s32 %s24, %s36
      %s164 = ssub.s32 %s25, %s32
      %s165 = sor.u32 %s163, %s164
      %p166 = scmp.eq.s32.totalorder %s165, 0
      %s168 = sadd.s32 %s167, 1
      %s169 = scalar_select %p166, %s167, %s168
      %p172 = pneg %p166
      %p173 = scmp.eq.s32.totalorder %s17, 3
      %p174 = por %p172, %p173
      %p175 = scmp.ne.s32.totalorder %s167, %s170
      %p176 = scmp.eq.s32.totalorder %s17, 0
      %p177 = por %p175, %p176
      %p178 = scmp.ne.s32.totalorder %s167, %s170
      %p179 = scmp.eq.s32.totalorder %s22, 3
      %p180 = por %p178, %p179
      %p181 = scmp.ne.s32.totalorder %s170, %s171
      %p182 = scmp.eq.s32.totalorder %s22, 0
      %p183 = por %p181, %p182
      %p184 = scmp.ne.s32.totalorder %s170, %s171
      %p185 = scmp.eq.s32.totalorder %s23, 3
      %p186 = por %p184, %p185
      %p188 = scmp.ne.s32.totalorder %s171, %s187
      %p189 = scmp.eq.s32.totalorder %s23, 0
      %p190 = por %p188, %p189
      %p191 = scmp.le.s32.totalorder 1, %s17
      %p192 = scmp.lt.s32.totalorder %s17, 5
      %p193 = pnand %p191, %p192
      %p194 = pneg %p193
      // Predicated region
      $region9: #{tpu_custom_call.1} parent=5 // pred_check
        _
      $region10: #{tpu_custom_call.1} parent=5 // pred_check_branch
        %196 = sbr.rel (%p193) target = $region12
      $region11: #{tpu_custom_call.1} parent=5 // pred_region
        %s197 = ssub.s32 %s17, 1
        // Predicated region
        $region13: #{tpu_custom_call.1} parent=11 // pred_check
          %p198 = pneg %p50
        $region14: #{tpu_custom_call.1} parent=11 // pred_check_branch
          %200 = sbr.rel (%p198) target = $region16
        $region15: #{tpu_custom_call.1} parent=11 // pred_region
          _
        $region16: #{tpu_custom_call.1} parent=11 // pred_fallthru
          _
        // Predicated region
        $region17: #{tpu_custom_call.1} parent=11 // pred_check
          %p201 = pneg %p71
        $region18: #{tpu_custom_call.1} parent=11 // pred_check_branch
          %203 = sbr.rel (%p201) target = $region20
        $region19: #{tpu_custom_call.1} parent=11 // pred_region
          _
        $region20: #{tpu_custom_call.1} parent=11 // pred_fallthru
          _
        // Predicated region
        $region21: #{tpu_custom_call.1} parent=11 // pred_check
          %p204 = pneg %p92
        $region22: #{tpu_custom_call.1} parent=11 // pred_check_branch
          %206 = sbr.rel (%p204) target = $region24
        $region23: #{tpu_custom_call.1} parent=11 // pred_region
          %208 = vsyncadd [#allocation5], 0
          %s209 = sshll.u32 %s3, 4
          %s210 = int_to_ptr.hbm [resolvable:$true] %s209
          %s211 = sshll.u32 [#allocation4], 4
          %s212 = int_to_ptr.vmem [resolvable:$true] %s211
          %217 = dma.hbm_to_vmem [thread:$0]  %s210, 3072, %s212, [#allocation5], 64, 64, 4
        $region24: #{tpu_custom_call.1} parent=11 // pred_fallthru
          _
        // Predicated region
        $region25: #{tpu_custom_call.1} parent=11 // pred_check
          %p218 = pneg %p113
        $region26: #{tpu_custom_call.1} parent=11 // pred_check_branch
          %220 = sbr.rel (%p218) target = $region28
        $region27: #{tpu_custom_call.1} parent=11 // pred_region
          _
        $region28: #{tpu_custom_call.1} parent=11 // pred_fallthru
          _
        // Predicated region
        $region29: #{tpu_custom_call.1} parent=11 // pred_check
          %p221 = pneg %p134
        $region30: #{tpu_custom_call.1} parent=11 // pred_check_branch
          %223 = sbr.rel (%p221) target = $region32
        $region31: #{tpu_custom_call.1} parent=11 // pred_region
          _
        $region32: #{tpu_custom_call.1} parent=11 // pred_fallthru
          _
        // Predicated region
        $region33: #{tpu_custom_call.1} parent=11 // pred_check
          %p224 = pneg %p155
        $region34: #{tpu_custom_call.1} parent=11 // pred_check_branch
          %226 = sbr.rel (%p224) target = $region36
        $region35: #{tpu_custom_call.1} parent=11 // pred_region
          _
        $region36: #{tpu_custom_call.1} parent=11 // pred_fallthru
          _
      $region12: #{tpu_custom_call.1} parent=5 // pred_fallthru
        _
      %p227 = scmp.lt.s32.totalorder %s17, 4
      // Predicated region
      $region37: #{tpu_custom_call.1} parent=5 // pred_check
        %p228 = pneg %p227
      $region38: #{tpu_custom_call.1} parent=5 // pred_check_branch
        %230 = sbr.rel (%p228) target = $region40
      $region39: #{tpu_custom_call.1} parent=5 // pred_region
        _
      $region40: #{tpu_custom_call.1} parent=5 // pred_fallthru
        _
      %p231 = scmp.le.s32.totalorder 1, %s17
      %p232 = scmp.lt.s32.totalorder %s17, 5
      %p233 = pnand %p231, %p232
      %p234 = pneg %p233
      // Predicated region
      $region41: #{tpu_custom_call.1} parent=5 // pred_check
        _
      $region42: #{tpu_custom_call.1} parent=5 // pred_check_branch
        %236 = sbr.rel (%p233) target = $region44
      $region43: #{tpu_custom_call.1} parent=5 // pred_region
        %s237 = ssub.s32 %s17, 1
        // Predicated region
        $region45: #{tpu_custom_call.1} parent=43 // pred_check
          %p238 = pneg %p92
        $region46: #{tpu_custom_call.1} parent=43 // pred_check_branch
          %240 = sbr.rel (%p238) target = $region48
        $region47: #{tpu_custom_call.1} parent=43 // pred_region
          %242 = dma.done [#allocation5], 3072
        $region48: #{tpu_custom_call.1} parent=43 // pred_fallthru
          _
        %p243 = pneg %p50
        %p244 = pneg %p47
        %p245 = pneg %p71
        %p246 = pneg %p68
        %p247 = pneg %p92
        %p248 = pneg %p89
        %p249 = pneg %p113
        %p250 = pneg %p110
        %p251 = pneg %p134
        %p252 = pneg %p131
        %p253 = pneg %p155
        %p254 = pneg %p152
        %p255 = pneg %p183
        %p256 = pneg %p180
        %s257 = sand.u32 %s170, 1
        %s258 = scalar_lea.sflag [#allocation6], %s257
        %s259 = sand.u32 %s170, 1
        %s260 = smul.addr %s259, 8
        %s261 = scalar_lea.vmem [#allocation7], %s260
        %p262 = scmp.lt.s32.totalorder %s27, 0
        %s263 = ssub.s32 0, %s27
        %s264 = scalar_select %p262, %s263, %s27
        %s265 = sand.u32 %s264, 1
        %s266 = ssub.s32 0, %s265
        %s267 = scalar_select %p262, %s266, %s265
        %p268 = scmp.ne.s32.totalorder %s267, 0
        %p269 = scmp.lt.s32.totalorder %s267, 0
        %p270 = pnand %p269, %p268
        %p271 = pneg %p270
        %s272 = sadd.s32 %s267, 2
        %s273 = scalar_select %p271, %s272, %s267
        %p274 = scmp.eq.s32.totalorder %s27, 0
        // Predicated region
        $region49: #{tpu_custom_call.1} parent=43 // pred_check
          %p275 = pneg %p274
        $region50: #{tpu_custom_call.1} parent=43 // pred_check_branch
          %277 = sbr.rel (%p275) target = $region52
        $region51: #{tpu_custom_call.1} parent=43 // pred_region
          %s278 = smul.u32 %s26, 24
          %s279 = scalar_lea.vmem %s0, %s278
          %s280 = smul.u32 %s273, 16
          %s281 = scalar_lea.vmem [#allocation2], %s280
          %s282 = scalar_lea.sflag [#allocation3], %s273
          // Predicated region
          $region53: #{tpu_custom_call.1} parent=51 // pred_check
            _
          $region54: #{tpu_custom_call.1} parent=51 // pred_check_branch
            %284 = sbr.rel (0) target = $region56
          $region55: #{tpu_custom_call.1} parent=51 // pred_region
            %s285 = scalar_lea.vmem %s279, 8
            %s286 = scalar_lea.vmem %s281, 8 [#allocation2]
            loop: start=0, step=1, limit=1
            $region57: #{tpu_custom_call.1} parent=55 // loop_pre_header
              _
            $region58: #{tpu_custom_call.1} parent=55 // loop_header
              %s288 = sphi 0, %s292
              %p289 = scmp.ge.s32.totalorder %s288, 1
              %s293 = sphi %s279, %s279
              %s294 = sphi %s281, %s281
            $region59: #{tpu_custom_call.1} parent=55 // loop_header_branch
              %291 = sbr.rel (%p289) target = $region63
            $region60: #{tpu_custom_call.1} parent=55 // loop_body
              %v295 = vld [vmem:[%s293] sm:$0xff]
              %296 = vst [vmem:[%s294] sm:$0xff] %v295
            $region61: #{tpu_custom_call.1} parent=55 // loop_footer
              %s292 = sadd.s32 1, %s288
            $region62: #{tpu_custom_call.1} parent=55 // loop_footer_branch
              %287 = sbr.rel target = $region58
            $region63: #{tpu_custom_call.1} parent=55 // loop_exit
              _
            %s298 = ssub.s32 4, 1
            loop: start=0, step=1, limit=1
            $region64: #{tpu_custom_call.1} parent=55 // loop_pre_header
              _
            $region65: #{tpu_custom_call.1} parent=55 // loop_header
              %s300 = sphi 0, %s304
              %p301 = scmp.ge.s32.totalorder %s300, 1
              %s305 = sphi %s285, %s285
              %s306 = sphi %s286, %s286
            $region66: #{tpu_custom_call.1} parent=55 // loop_header_branch
              %303 = sbr.rel (%p301) target = $region70
            $region67: #{tpu_custom_call.1} parent=55 // loop_body
              %v307 = vld [vmem:[%s305] sm:%s298]
              %308 = vst [vmem:[%s306] sm:%s298] %v307
            $region68: #{tpu_custom_call.1} parent=55 // loop_footer
              %s304 = sadd.s32 1, %s300
            $region69: #{tpu_custom_call.1} parent=55 // loop_footer_branch
              %299 = sbr.rel target = $region65
            $region70: #{tpu_custom_call.1} parent=55 // loop_exit
              _
          $region56: #{tpu_custom_call.1} parent=51 // pred_fallthru
            _
          // Predicated region
          $region71: #{tpu_custom_call.1} parent=51 // pred_check
            _
          $region72: #{tpu_custom_call.1} parent=51 // pred_check_branch
            %311 = sbr.rel (0) target = $region74
          $region73: #{tpu_custom_call.1} parent=51 // pred_region
            %312 = vsyncadd %s282, 160
          $region74: #{tpu_custom_call.1} parent=51 // pred_fallthru
            _
        $region52: #{tpu_custom_call.1} parent=43 // pred_fallthru
          _
        %s313 = smul.u32 %s273, 16
        %s314 = scalar_lea.vmem [#allocation2], %s313
        %s315 = scalar_lea.sflag [#allocation3], %s273
        %s316 = smul.u32 10, 1
        %s317 = sshll.u32 %s316, 4
        %318 = dma.done %s315, %s317
        %s319 = sadd.s32 %s27, 1
        %p320 = scmp.lt.s32.totalorder %s319, 2
        // Predicated region
        $region75: #{tpu_custom_call.1} parent=43 // pred_check
          %p321 = pneg %p320
        $region76: #{tpu_custom_call.1} parent=43 // pred_check_branch
          %323 = sbr.rel (%p321) target = $region78
        $region77: #{tpu_custom_call.1} parent=43 // pred_region
          %s324 = ssub.s32 1, %s273
          %s325 = smul.u32 %s319, 8
          %s326 = smul.u32 %s26, 24
          %s327 = sadd.s32 %s325, %s326
          %s328 = scalar_lea.vmem %s0, %s327
          %s329 = smul.u32 %s324, 16
          %s330 = scalar_lea.vmem [#allocation2], %s329
          %s331 = scalar_lea.sflag [#allocation3], %s324
          // Predicated region
          $region79: #{tpu_custom_call.1} parent=77 // pred_check
            _
          $region80: #{tpu_custom_call.1} parent=77 // pred_check_branch
            %333 = sbr.rel (0) target = $region82
          $region81: #{tpu_custom_call.1} parent=77 // pred_region
            %s334 = scalar_lea.vmem %s328, 8
            %s335 = scalar_lea.vmem %s330, 8 [#allocation2]
            loop: start=0, step=1, limit=1
            $region83: #{tpu_custom_call.1} parent=81 // loop_pre_header
              _
            $region84: #{tpu_custom_call.1} parent=81 // loop_header
              %s337 = sphi 0, %s341
              %p338 = scmp.ge.s32.totalorder %s337, 1
              %s342 = sphi %s328, %s328
              %s343 = sphi %s330, %s330
            $region85: #{tpu_custom_call.1} parent=81 // loop_header_branch
              %340 = sbr.rel (%p338) target = $region89
            $region86: #{tpu_custom_call.1} parent=81 // loop_body
              %v344 = vld [vmem:[%s342] sm:$0xff]
              %345 = vst [vmem:[%s343] sm:$0xff] %v344
            $region87: #{tpu_custom_call.1} parent=81 // loop_footer
              %s341 = sadd.s32 1, %s337
            $region88: #{tpu_custom_call.1} parent=81 // loop_footer_branch
              %336 = sbr.rel target = $region84
            $region89: #{tpu_custom_call.1} parent=81 // loop_exit
              _
            %s347 = ssub.s32 4, 1
            loop: start=0, step=1, limit=1
            $region90: #{tpu_custom_call.1} parent=81 // loop_pre_header
              _
            $region91: #{tpu_custom_call.1} parent=81 // loop_header
              %s349 = sphi 0, %s353
              %p350 = scmp.ge.s32.totalorder %s349, 1
              %s354 = sphi %s334, %s334
              %s355 = sphi %s335, %s335
            $region92: #{tpu_custom_call.1} parent=81 // loop_header_branch
              %352 = sbr.rel (%p350) target = $region96
            $region93: #{tpu_custom_call.1} parent=81 // loop_body
              %v356 = vld [vmem:[%s354] sm:%s347]
              %357 = vst [vmem:[%s355] sm:%s347] %v356
            $region94: #{tpu_custom_call.1} parent=81 // loop_footer
              %s353 = sadd.s32 1, %s349
            $region95: #{tpu_custom_call.1} parent=81 // loop_footer_branch
              %348 = sbr.rel target = $region91
            $region96: #{tpu_custom_call.1} parent=81 // loop_exit
              _
          $region82: #{tpu_custom_call.1} parent=77 // pred_fallthru
            _
          // Predicated region
          $region97: #{tpu_custom_call.1} parent=77 // pred_check
            _
          $region98: #{tpu_custom_call.1} parent=77 // pred_check_branch
            %360 = sbr.rel (0) target = $region100
          $region99: #{tpu_custom_call.1} parent=77 // pred_region
            %361 = vsyncadd %s331, 160
          $region100: #{tpu_custom_call.1} parent=77 // pred_fallthru
            _
        $region78: #{tpu_custom_call.1} parent=43 // pred_fallthru
          _
        %v362 = vld [vmem:[%s314] sm:$0xff]
        %v363 = vld [vmem:[%s314 + $0x8] sm:$0x3]
        %364 = vadd.xlane.f32.xlu0 %v362
        %v365 = vpop.xlane.xlu0 %364
        %vm366 = vcmask 1041408
        %v367 = vsel %vm366, %v363, 0.0
        %368 = vadd.xlane.f32.xlu0 %v367
        %v369 = vpop.xlane.xlu0 %368
        %v370 = vmul.f32 %v365, 0.03125
        %v371 = vmul.f32 %v369, 0.03125
        %v372 = vsub.f32 %v362, %v370
        %v373 = vsub.f32 %v363, %v371
        %v374 = vlaneseq
        %v375 = vand.u32 %v374, 127
        %vm376 = vcmp.lt.s32.totalorder %v375, 32
        %v377 = vsel %vm376, %v372, 0.0
        %v378 = vsel %vm376, %v373, 0.0
        %v379 = vmul.f32 %v377, %v377
        %v380 = vmul.f32 %v378, %v378
        %381 = vadd.xlane.f32.xlu0 %v379
        %v382 = vpop.xlane.xlu0 %381
        %v383 = vsel %vm366, %v380, 0.0
        %384 = vadd.xlane.f32.xlu0 %v383
        %v385 = vpop.xlane.xlu0 %384
        %v386 = vmul.f32 %v382, 0.03125
        %v387 = vmul.f32 %v385, 0.03125
        %v388 = vadd.f32 %v386, 1e-05
        %v389 = vadd.f32 %v387, 1e-05
        %v390 = vrsqrt.pop %v388
        %v391 = vmul.f32 %v390, %v388
        %v392 = vmul.f32 %v391, %v390
        %v393 = vmul.f32 0.5, %v392
        %v394 = vsub.f32 1.5, %v393
        %v395 = vmul.f32 %v390, %v394
        %vm396 = vweird.f32 %v388
        %vm397 = vweird.f32 %v390
        %vm398 = vmor %vm396, %vm397
        %v399 = vsel %vm398, %v390, %v395
        %v400 = vrsqrt.pop %v389
        %v401 = vmul.f32 %v400, %v389
        %v402 = vmul.f32 %v401, %v400
        %v403 = vmul.f32 0.5, %v402
        %v404 = vsub.f32 1.5, %v403
        %v405 = vmul.f32 %v400, %v404
        %vm406 = vweird.f32 %v389
        %vm407 = vweird.f32 %v400
        %vm408 = vmor %vm406, %vm407
        %v409 = vsel %vm408, %v400, %v405
        %v410 = vmul.f32 %v377, %v399
        %v411 = vmul.f32 %v378, %v409
        %v412 = vld [vmem:[%s1] sm:$0x1]
        %v414 = vperm.slane %v412, 0
        %v416 = vmul.f32 %v410, %v414
        %v417 = vmul.f32 %v411, %v414
        %v418 = vld [vmem:[%s2] sm:$0x1]
        %v420 = vperm.slane %v418, 0
        %v422 = vadd.f32 %v416, %v420
        %v423 = vadd.f32 %v417, %v420
        %v424 = vlaneseq
        %v425 = vshrl.u32 %v424, 7
        %v426 = vadd.s32 %v425, 8
        %s427 = smul.u32 %s27, 8
        %s428 = ssub.s32 %s427, 1
        %v429 = vstv %s428
        %v430 = vadd.s32 %v429, %v425
        %v431 = vadd.s32 %v429, %v426
        %vm432 = vcmp.ge.s32.totalorder %v430, 0
        %vm433 = vcmp.ge.s32.totalorder %v431, 0
        %vm434 = vcmp.lt.s32.totalorder %v430, 16
        %vm435 = vcmp.lt.s32.totalorder %v431, 16
        %vm436 = vmand %vm432, %vm434
        %vm437 = vmand %vm433, %vm435
        %v438 = vsel %vm436, 1, 0
        %v439 = vsel %vm437, 1, 0
        %vm440 = vcmp.eq.s32.totalorder %v438, 1
        %vm441 = vcmp.eq.s32.totalorder %v439, 1
        %v442 = vsel %vm440, %v422, 0.0
        %v443 = vsel %vm441, %v423, 0.0
        %v444 = vpack.c.bf16 %v442, %v442
        %v445 = vpack.c.bf16 %v443, %v443
        %v446 = vld [vmem:[#allocation4] sm:$0xf]
        %v447 = vld [vmem:[#allocation4 + $0x4] sm:$0xf]
        %v448 = vld [vmem:[#allocation4 + $0x8] sm:$0xf]
        %v449 = vld [vmem:[#allocation4 + $0xc] sm:$0xf]
        %v450 = vld [vmem:[#allocation4 + $0x10] sm:$0xf]
        %v451 = vld [vmem:[#allocation4 + $0x14] sm:$0xf]
        %v452 = vld [vmem:[#allocation4 + $0x18] sm:$0xf]
        %v453 = vld [vmem:[#allocation4 + $0x1c] sm:$0xf]
        %v454 = vld [vmem:[#allocation4 + $0x20] sm:$0xf]
        %v455 = vld [vmem:[#allocation4 + $0x24] sm:$0xf]
        %v456 = vld [vmem:[#allocation4 + $0x28] sm:$0xf]
        %v457 = vld [vmem:[#allocation4 + $0x2c] sm:$0xf]
        %v458 = vld [vmem:[#allocation4 + $0x30] sm:$0xf]
        %v459 = vld [vmem:[#allocation4 + $0x34] sm:$0xf]
        %v460 = vld [vmem:[#allocation4 + $0x38] sm:$0xf]
        %v461 = vld [vmem:[#allocation4 + $0x3c] sm:$0xf]
        %s462 = scalar_lea.vmem [#allocation4], 64
        %v463 = vld [vmem:[%s462] sm:$0xf]
        %v464 = vld [vmem:[%s462 + $0x4] sm:$0xf]
        %v465 = vld [vmem:[%s462 + $0x8] sm:$0xf]
        %v466 = vld [vmem:[%s462 + $0xc] sm:$0xf]
        %v467 = vld [vmem:[%s462 + $0x10] sm:$0xf]
        %v468 = vld [vmem:[%s462 + $0x14] sm:$0xf]
        %v469 = vld [vmem:[%s462 + $0x18] sm:$0xf]
        %v470 = vld [vmem:[%s462 + $0x1c] sm:$0xf]
        %v471 = vld [vmem:[%s462 + $0x20] sm:$0xf]
        %v472 = vld [vmem:[%s462 + $0x24] sm:$0xf]
        %v473 = vld [vmem:[%s462 + $0x28] sm:$0xf]
        %v474 = vld [vmem:[%s462 + $0x2c] sm:$0xf]
        %v475 = vld [vmem:[%s462 + $0x30] sm:$0xf]
        %v476 = vld [vmem:[%s462 + $0x34] sm:$0xf]
        %v477 = vld [vmem:[%s462 + $0x38] sm:$0xf]
        %v478 = vld [vmem:[%s462 + $0x3c] sm:$0xf]
        %v481 = vunpack.c.l.b16 %v444
        %v482 = vunpack.c.l.b16 %v445
        %v483 = vpack.c.b16 %v482, %v481
        %v485 = vshrl.u32 %v483, 16
        %v487 = vshll.u32 %v483, 16
        %v489 = vrot.slane %v487, 1
        %v490 = vor.u32 %v485, %v489
        %v508 = vunpack.c.l.b16 %v463
        %v509 = vunpack.c.l.b16 %v464
        %v510 = vunpack.c.l.b16 %v465
        %v511 = vunpack.c.l.b16 %v466
        %v512 = vunpack.c.l.b16 %v467
        %v513 = vunpack.c.l.b16 %v468
        %v514 = vunpack.c.l.b16 %v469
        %v515 = vunpack.c.l.b16 %v470
        %v516 = vunpack.c.l.b16 %v471
        %v517 = vunpack.c.l.b16 %v472
        %v518 = vunpack.c.l.b16 %v473
        %v519 = vunpack.c.l.b16 %v474
        %v520 = vunpack.c.l.b16 %v475
        %v521 = vunpack.c.l.b16 %v476
        %v522 = vunpack.c.l.b16 %v477
        %v523 = vunpack.c.l.b16 %v478
        %v524 = vpack.c.b16 %v509, %v508
        %v525 = vpack.c.b16 %v511, %v510
        %v526 = vpack.c.b16 %v513, %v512
        %v527 = vpack.c.b16 %v515, %v514
        %v528 = vpack.c.b16 %v517, %v516
        %v529 = vpack.c.b16 %v519, %v518
        %v530 = vpack.c.b16 %v521, %v520
        %v531 = vpack.c.b16 %v523, %v522
        %540 = vmatpush.bf16.msra.mxu0 %v531
        %541 = vmatpush.bf16.msra.mxu0 %v530
        %542 = vmatpush.bf16.msra.mxu0 %v529
        %543 = vmatpush.bf16.msra.mxu0 %v528
        %544 = vmatpush.bf16.msra.mxu0 %v527
        %545 = vmatpush.bf16.msra.mxu0 %v526
        %546 = vmatpush.bf16.msra.mxu0 %v525
        %547 = vmatpush.bf16.msra.mxu0 %v524
        %548 = vmatmul.bf16.gmra.mxu0 %v490
        %v549 = vpop.f32.mrf.mxu0
        %v550 = vadd.f32 0.0, %v549
        %v551 = vpop.f32.mrf.mxu0
        %552 = vdwg.mxu0
        %v569 = vunpack.c.l.b16 %v446
        %v570 = vunpack.c.l.b16 %v447
        %v571 = vunpack.c.l.b16 %v448
        %v572 = vunpack.c.l.b16 %v449
        %v573 = vunpack.c.l.b16 %v450
        %v574 = vunpack.c.l.b16 %v451
        %v575 = vunpack.c.l.b16 %v452
        %v576 = vunpack.c.l.b16 %v453
        %v577 = vunpack.c.l.b16 %v454
        %v578 = vunpack.c.l.b16 %v455
        %v579 = vunpack.c.l.b16 %v456
        %v580 = vunpack.c.l.b16 %v457
        %v581 = vunpack.c.l.b16 %v458
        %v582 = vunpack.c.l.b16 %v459
        %v583 = vunpack.c.l.b16 %v460
        %v584 = vunpack.c.l.b16 %v461
        %v585 = vpack.c.b16 %v570, %v569
        %v586 = vpack.c.b16 %v572, %v571
        %v587 = vpack.c.b16 %v574, %v573
        %v588 = vpack.c.b16 %v576, %v575
        %v589 = vpack.c.b16 %v578, %v577
        %v590 = vpack.c.b16 %v580, %v579
        %v591 = vpack.c.b16 %v582, %v581
        %v592 = vpack.c.b16 %v584, %v583
        %601 = vmatpush.bf16.msra.mxu0 %v592
        %602 = vmatpush.bf16.msra.mxu0 %v591
        %603 = vmatpush.bf16.msra.mxu0 %v590
        %604 = vmatpush.bf16.msra.mxu0 %v589
        %605 = vmatpush.bf16.msra.mxu0 %v588
        %606 = vmatpush.bf16.msra.mxu0 %v587
        %607 = vmatpush.bf16.msra.mxu0 %v586
        %608 = vmatpush.bf16.msra.mxu0 %v585
        %609 = vmatmul.bf16.gmra.mxu0 %v444
        %v610 = vpop.f32.mrf.mxu0
        %v611 = vadd.f32 %v550, %v610
        %v612 = vpop.f32.mrf.mxu0
        %613 = vdwg.mxu0
        %s614 = scalar_lea.vmem [#allocation4], 128
        %v615 = vld [vmem:[%s614] sm:$0xf]
        %v616 = vld [vmem:[%s614 + $0x4] sm:$0xf]
        %v617 = vld [vmem:[%s614 + $0x8] sm:$0xf]
        %v618 = vld [vmem:[%s614 + $0xc] sm:$0xf]
        %v619 = vld [vmem:[%s614 + $0x10] sm:$0xf]
        %v620 = vld [vmem:[%s614 + $0x14] sm:$0xf]
        %v621 = vld [vmem:[%s614 + $0x18] sm:$0xf]
        %v622 = vld [vmem:[%s614 + $0x1c] sm:$0xf]
        %v623 = vld [vmem:[%s614 + $0x20] sm:$0xf]
        %v624 = vld [vmem:[%s614 + $0x24] sm:$0xf]
        %v625 = vld [vmem:[%s614 + $0x28] sm:$0xf]
        %v626 = vld [vmem:[%s614 + $0x2c] sm:$0xf]
        %v627 = vld [vmem:[%s614 + $0x30] sm:$0xf]
        %v628 = vld [vmem:[%s614 + $0x34] sm:$0xf]
        %v629 = vld [vmem:[%s614 + $0x38] sm:$0xf]
        %v630 = vld [vmem:[%s614 + $0x3c] sm:$0xf]
        %v631 = vrot.slane %v483, 1
        %v649 = vunpack.c.l.b16 %v615
        %v650 = vunpack.c.l.b16 %v616
        %v651 = vunpack.c.l.b16 %v617
        %v652 = vunpack.c.l.b16 %v618
        %v653 = vunpack.c.l.b16 %v619
        %v654 = vunpack.c.l.b16 %v620
        %v655 = vunpack.c.l.b16 %v621
        %v656 = vunpack.c.l.b16 %v622
        %v657 = vunpack.c.l.b16 %v623
        %v658 = vunpack.c.l.b16 %v624
        %v659 = vunpack.c.l.b16 %v625
        %v660 = vunpack.c.l.b16 %v626
        %v661 = vunpack.c.l.b16 %v627
        %v662 = vunpack.c.l.b16 %v628
        %v663 = vunpack.c.l.b16 %v629
        %v664 = vunpack.c.l.b16 %v630
        %v665 = vpack.c.b16 %v650, %v649
        %v666 = vpack.c.b16 %v652, %v651
        %v667 = vpack.c.b16 %v654, %v653
        %v668 = vpack.c.b16 %v656, %v655
        %v669 = vpack.c.b16 %v658, %v657
        %v670 = vpack.c.b16 %v660, %v659
        %v671 = vpack.c.b16 %v662, %v661
        %v672 = vpack.c.b16 %v664, %v663
        %681 = vmatpush.bf16.msra.mxu0 %v672
        %682 = vmatpush.bf16.msra.mxu0 %v671
        %683 = vmatpush.bf16.msra.mxu0 %v670
        %684 = vmatpush.bf16.msra.mxu0 %v669
        %685 = vmatpush.bf16.msra.mxu0 %v668
        %686 = vmatpush.bf16.msra.mxu0 %v667
        %687 = vmatpush.bf16.msra.mxu0 %v666
        %688 = vmatpush.bf16.msra.mxu0 %v665
        %689 = vmatmul.bf16.gmra.mxu0 %v631
        %v690 = vpop.f32.mrf.mxu0
        %v691 = vadd.f32 0.0, %v690
        %v692 = vpop.f32.mrf.mxu0
        %693 = vdwg.mxu0
        %v694 = vadd.f32 %v611, %v691
        %v695 = vld [vmem:[%s4] sm:$0x1]
        %v697 = vperm.slane %v695, 0
        %v699 = vadd.f32 %v694, %v697
        %v700 = vmax.f32 %v699, 0.0
        %v701 = vpack.c.bf16 %v700, %v700
        %v702 = vld [vmem:[%s5] sm:$0xf]
        %v703 = vld [vmem:[%s5 + $0x4] sm:$0xf]
        %v704 = vld [vmem:[%s5 + $0x8] sm:$0xf]
        %v705 = vld [vmem:[%s5 + $0xc] sm:$0xf]
        %v706 = vld [vmem:[%s5 + $0x10] sm:$0xf]
        %v707 = vld [vmem:[%s5 + $0x14] sm:$0xf]
        %v708 = vld [vmem:[%s5 + $0x18] sm:$0xf]
        %v709 = vld [vmem:[%s5 + $0x1c] sm:$0xf]
        %v710 = vld [vmem:[%s5 + $0x20] sm:$0xf]
        %v711 = vld [vmem:[%s5 + $0x24] sm:$0xf]
        %v712 = vld [vmem:[%s5 + $0x28] sm:$0xf]
        %v713 = vld [vmem:[%s5 + $0x2c] sm:$0xf]
        %v714 = vld [vmem:[%s5 + $0x30] sm:$0xf]
        %v715 = vld [vmem:[%s5 + $0x34] sm:$0xf]
        %v716 = vld [vmem:[%s5 + $0x38] sm:$0xf]
        %v717 = vld [vmem:[%s5 + $0x3c] sm:$0xf]
        %v718 = vld [vmem:[%s6] sm:$0x1]
        %v720 = vperm.slane %v718, 0
        %v738 = vunpack.c.l.b16 %v702
        %v739 = vunpack.c.l.b16 %v703
        %v740 = vunpack.c.l.b16 %v704
        %v741 = vunpack.c.l.b16 %v705
        %v742 = vunpack.c.l.b16 %v706
        %v743 = vunpack.c.l.b16 %v707
        %v744 = vunpack.c.l.b16 %v708
        %v745 = vunpack.c.l.b16 %v709
        %v746 = vunpack.c.l.b16 %v710
        %v747 = vunpack.c.l.b16 %v711
        %v748 = vunpack.c.l.b16 %v712
        %v749 = vunpack.c.l.b16 %v713
        %v750 = vunpack.c.l.b16 %v714
        %v751 = vunpack.c.l.b16 %v715
        %v752 = vunpack.c.l.b16 %v716
        %v753 = vunpack.c.l.b16 %v717
        %v754 = vpack.c.b16 %v739, %v738
        %v755 = vpack.c.b16 %v741, %v740
        %v756 = vpack.c.b16 %v743, %v742
        %v757 = vpack.c.b16 %v745, %v744
        %v758 = vpack.c.b16 %v747, %v746
        %v759 = vpack.c.b16 %v749, %v748
        %v760 = vpack.c.b16 %v751, %v750
        %v761 = vpack.c.b16 %v753, %v752
        %770 = vmatpush.bf16.msra.mxu0 %v761
        %771 = vmatpush.bf16.msra.mxu0 %v760
        %772 = vmatpush.bf16.msra.mxu0 %v759
        %773 = vmatpush.bf16.msra.mxu0 %v758
        %774 = vmatpush.bf16.msra.mxu0 %v757
        %775 = vmatpush.bf16.msra.mxu0 %v756
        %776 = vmatpush.bf16.msra.mxu0 %v755
        %777 = vmatpush.bf16.msra.mxu0 %v754
        %778 = vmatmul.bf16.gmra.mxu0 %v701
        %v779 = vpop.f32.mrf.mxu0
        %v780 = vadd.f32 %v720, %v779
        %v781 = vpop.f32.mrf.mxu0
        %782 = vdwg.mxu0
        %vm785 = vcmask 1046528
        %v786 = vrot.slane %v362, 1
        %v787 = vrot.slane %v363, 1
        %v788 = vsel %vm785, %v786, %v787
        %v790 = vadd.f32 %v780, %v788
        %791 = vst [vmem:[%s261] sm:$0xff] %v790
        %s792 = sand.u32 %s170, 1
        %s793 = scalar_lea.sflag [#allocation6], %s792
        %s794 = sand.u32 %s170, 1
        %s795 = smul.addr %s794, 8
        %s796 = scalar_lea.vmem [#allocation7], %s795
        // Predicated region
        $region101: #{tpu_custom_call.1} parent=43 // pred_check
          %p797 = pneg %p180
        $region102: #{tpu_custom_call.1} parent=43 // pred_check_branch
          %799 = sbr.rel (%p797) target = $region104
        $region103: #{tpu_custom_call.1} parent=43 // pred_region
          %801 = vsyncadd %s793, 0
          %s802 = smul.addr %s26, 2
          %s803 = sadd.s32 %s27, %s802
          %s804 = smul.addr %s803, 8
          %s805 = scalar_lea.hbm %s7, %s804
          %s807 = sshll.u32 %s796, 4
          %s808 = int_to_ptr.vmem [resolvable:$true] %s807
          %s809 = sshll.u32 %s805, 4
          %s810 = int_to_ptr.hbm [resolvable:$true] %s809
          %812 = dma.vmem_to_hbm [thread:$0]  %s808, 128, %s810, %s793
        $region104: #{tpu_custom_call.1} parent=43 // pred_fallthru
          _
      $region44: #{tpu_custom_call.1} parent=5 // pred_fallthru
        _
      %p813 = scmp.le.s32.totalorder 2, %s17
      // Predicated region
      $region105: #{tpu_custom_call.1} parent=5 // pred_check
        %p814 = pneg %p813
      $region106: #{tpu_custom_call.1} parent=5 // pred_check_branch
        %816 = sbr.rel (%p814) target = $region108
      $region107: #{tpu_custom_call.1} parent=5 // pred_region
        %s817 = ssub.s32 %s17, 2
        // Predicated region
        $region109: #{tpu_custom_call.1} parent=107 // pred_check
          %p818 = pneg %p186
        $region110: #{tpu_custom_call.1} parent=107 // pred_check_branch
          %820 = sbr.rel (%p818) target = $region112
        $region111: #{tpu_custom_call.1} parent=107 // pred_region
          %s821 = sand.u32 %s171, 1
          %s822 = scalar_lea.sflag [#allocation6], %s821
          %s823 = sand.u32 %s171, 1
          %s824 = smul.addr %s823, 8
          %s825 = scalar_lea.vmem [#allocation7], %s824
          %827 = dma.done %s822, 128
        $region112: #{tpu_custom_call.1} parent=107 // pred_fallthru
          _
      $region108: #{tpu_custom_call.1} parent=5 // pred_fallthru
        _
    $region6: #{tpu_custom_call.1} parent=1 // loop_footer
      %s21 = sadd.s32 1, %s17
    $region7: #{tpu_custom_call.1} parent=1 // loop_footer_branch
      %16 = sbr.rel target = $region3
    $region8: #{tpu_custom_call.1} parent=1 // loop_exit
      _
    %828 = vsyncpa [#allocation5], 1
    %s829 = scalar_lea.sflag [#allocation5], 1
    %830 = vsyncpa %s829, 1
    %831 = vsyncpa [#allocation6], 1
    %s832 = scalar_lea.sflag [#allocation6], 1
    %833 = vsyncpa %s832, 1
  %834 = vsyncmov [#allocation3]
  %s835 = vpop.sfrf %834
  %p836 = scmp.eq.s32.totalorder %s835, 0
  %p837 = pneg %p836
  %839 = shalt.err (%p837)
  %s840 = scalar_lea.sflag [#allocation3], 1
  %841 = vsyncmov %s840
  %s842 = vpop.sfrf %841
  %p843 = scmp.eq.s32.totalorder %s842, 0
  %p844 = pneg %p843
  %846 = shalt.err (%p844)

</llo_original>
